<compile_context>
chip_gen: v6e
topology: v6e:2x2x1
jax: 0.10.0
libtpu: 0.0.40
codegen_flags: <defaults>
</compile_context>

<pallas_src>
import functools

import jax
import jax.numpy as jnp
from jax.experimental import pallas as pl
from jax.experimental.pallas import tpu as pltpu

LANES = 128
MAX_TILE_ROWS = 2048          # (2048, 128) f32 = 1 MiB per input tile
_LN2 = 0.6931471805599453


def _round_up(x, m):
    return ((x + m - 1) // m) * m


def _hubosh_kernel(pred_ref, true_ref, out_ref, *,
                   n_valid, tile_rows, tiles_per_split, beta):
    c = pl.program_id(0)          # parallel split (one per TensorCore on v7x)
    i = pl.program_id(1)          # reduction step within this split

    # out_ref is this split's resident (8, 128) partial-sum accumulator.
    @pl.when(i == 0)
    def _():
        out_ref[...] = jnp.zeros_like(out_ref)

    pred = pred_ref[...].astype(jnp.float32)
    true = true_ref[...].astype(jnp.float32)

    # LogCosh term, overflow-safe:
    #   log(cosh(d)) = |d| + log(1 + exp(-2|d|)) - ln(2)
    # (plain log instead of log1p: the argument is in [1, 2] here, so the two
    #  are numerically identical and log is guaranteed to lower on TPU).
    d = true - pred + 1e-12
    a = jnp.abs(d)
    log_cosh = a + jnp.log(1.0 + jnp.exp(-2.0 * a)) - _LN2

    # SmoothL1 (Huber) with beta; 0.5/beta folded into a constant multiply.
    ad = jnp.abs(pred - true)
    huber = jnp.where(ad < beta, ad * ad * (0.5 / beta), ad - 0.5 * beta)

    contrib = log_cosh + huber                          # (tile_rows, 128) f32

    # Only tiles overlapping the zero-padded tail pay for masking.
    block_start = (c * tiles_per_split + i) * (tile_rows * LANES)
    needs_mask = block_start + tile_rows * LANES > n_valid

    @pl.when(jnp.logical_not(needs_mask))
    def _():
        # Fold row groups into the (8, 128) accumulator: pure VPU vreg adds.
        out_ref[...] += contrib.reshape(tile_rows // 8, 8, LANES).sum(axis=0)

    @pl.when(needs_mask)
    def _():
        row_idx = jax.lax.broadcasted_iota(jnp.int32, contrib.shape, 0)
        col_idx = jax.lax.broadcasted_iota(jnp.int32, contrib.shape, 1)
        flat_idx = block_start + row_idx * LANES + col_idx
        masked = jnp.where(flat_idx < n_valid, contrib, 0.0)
        out_ref[...] += masked.reshape(tile_rows // 8, 8, LANES).sum(axis=0)


def hubosh_loss(y_pred, y_true, *, beta=0.1):
    assert y_pred.shape == y_true.shape
    n = int(y_pred.size)

    # Flatten to a lane-dense (rows, 128) slab; the f32 cast happens in-kernel
    # so bf16 inputs keep their halved HBM footprint.
    flat_p = jnp.ravel(y_pred)
    flat_t = jnp.ravel(y_true)

    rows_needed = _round_up(n, LANES) // LANES
    tile_rows = min(MAX_TILE_ROWS, _round_up(rows_needed, 8))
    num_tiles = _round_up(rows_needed, tile_rows) // tile_rows
    num_splits = 2 if num_tiles >= 2 else 1      # feed both v7x TensorCores
    num_tiles = _round_up(num_tiles, num_splits)
    tiles_per_split = num_tiles // num_splits
    padded_rows = num_tiles * tile_rows
    padded = padded_rows * LANES

    if padded != n:
        # Only pays an extra HBM pass when the size is not already aligned.
        flat_p = jnp.pad(flat_p, (0, padded - n))
        flat_t = jnp.pad(flat_t, (0, padded - n))
    p2d = flat_p.reshape(padded_rows, LANES)
    t2d = flat_t.reshape(padded_rows, LANES)

    kernel = functools.partial(
        _hubosh_kernel, n_valid=n, tile_rows=tile_rows,
        tiles_per_split=tiles_per_split, beta=float(beta))

    in_map = lambda c, i: (c * tiles_per_split + i, 0)

    partials = pl.pallas_call(
        kernel,
        out_shape=jax.ShapeDtypeStruct((num_splits * 8, LANES), jnp.float32),
        grid_spec=pltpu.PrefetchScalarGridSpec(
            num_scalar_prefetch=0,
            grid=(num_splits, tiles_per_split),
            in_specs=[
                pl.BlockSpec((tile_rows, LANES), in_map),
                pl.BlockSpec((tile_rows, LANES), in_map),
            ],
            out_specs=pl.BlockSpec((8, LANES), lambda c, i: (c, 0)),
        ),
        compiler_params=pltpu.CompilerParams(
            dimension_semantics=("parallel", "arbitrary"),
        ),
    )(p2d, t2d)

    # Tiny final reduce + mean normalisation in plain JAX.
    # mean(huber) + mean(logcosh) == sum(huber_i + logcosh_i) / N
    return jnp.sum(partials) / jnp.float32(n)


def _hubosh_ref(y_pred, y_true, beta=0.1):
    d = y_true - y_pred
    log_cosh = jnp.mean(jnp.log(jnp.cosh(d + 1e-12)))
    ad = jnp.abs(y_pred - y_true)
    huber = jnp.mean(jnp.where(ad < beta, 0.5 * ad * ad / beta, ad - 0.5 * beta))
    return huber + log_cosh


if __name__ == "__main__":
    key = jax.random.PRNGKey(0)
    k1, k2, k3, k4 = jax.random.split(key, 4)

    # Small NCHW inputs (single tile, single split).
    y_pred = jax.random.normal(k1, (2, 4, 16, 16), dtype=jnp.float32)
    y_true = jax.random.normal(k2, (2, 4, 16, 16), dtype=jnp.float32)
    out = jax.block_until_ready(hubosh_loss(y_pred, y_true))
    ref = _hubosh_ref(y_pred, y_true)
    assert jnp.allclose(out, ref, rtol=1e-5, atol=1e-5), (out, ref)

    # Larger, non-aligned input: exercises multi-tile grid, the 2-way
    # parallel split and the padded-tail masking path.
    y_pred2 = jax.random.normal(k3, (2, 5, 123, 217), dtype=jnp.float32)
    y_true2 = jax.random.normal(k4, (2, 5, 123, 217), dtype=jnp.float32)
    out2 = jax.block_until_ready(hubosh_loss(y_pred2, y_true2))
    ref2 = _hubosh_ref(y_pred2, y_true2)
    assert jnp.allclose(out2, ref2, rtol=1e-5, atol=1e-5), (out2, ref2)

    print("KERNEL_OK")
</pallas_src>

<mosaic_0001>
module attributes {stable_mosaic.version = 11 : i64} {
  func.func @_hubosh_kernel(%arg0: i32, %arg1: i32, %arg2: memref<16x128xf32, #tpu.memory_space<vmem>>, %arg3: memref<16x128xf32, #tpu.memory_space<vmem>>, %arg4: memref<8x128xf32, #tpu.memory_space<vmem>>) attributes {dimension_semantics = [#tpu.dimension_semantics<parallel>, #tpu.dimension_semantics<arbitrary>], iteration_bounds = array<i64: 1, 1>, scalar_prefetch = 0 : i64, scratch_operands = 0 : i64, tpu.core_type = #tpu.core_type<tc>, window_params = [{transform_indices = @transform_0, window_bounds = array<i64: 16, 128>}, {transform_indices = @transform_1, window_bounds = array<i64: 16, 128>}, {transform_indices = @transform_2, window_bounds = array<i64: 8, 128>}]} {
    %c0_i32 = arith.constant 0 : i32
    %0 = arith.cmpi eq, %arg1, %c0_i32 : i32
    %1 = arith.extui %0 : i1 to i32
    %c0_i32_0 = arith.constant 0 : i32
    %2 = arith.cmpi ne, %1, %c0_i32_0 : i32
    scf.if %2 {
      %cst_14 = arith.constant 0.000000e+00 : f32
      %39 = vector.broadcast %cst_14 : f32 to vector<8x128xf32>
      %c0_15 = arith.constant 0 : index
      %c0_16 = arith.constant 0 : index
      %40 = vector.load %arg4[%c0_15, %c0_16] : memref<8x128xf32, #tpu.memory_space<vmem>>, vector<8x128xf32>
      tpu.vector_store %arg4[%c0_15, %c0_16], %39 {strides = array<i32>} : memref<8x128xf32, #tpu.memory_space<vmem>>, vector<8x128xf32>,
    } else {
    }
    %c0 = arith.constant 0 : index
    %c0_1 = arith.constant 0 : index
    %3 = vector.load %arg2[%c0, %c0_1] : memref<16x128xf32, #tpu.memory_space<vmem>>, vector<16x128xf32>
    %c0_2 = arith.constant 0 : index
    %c0_3 = arith.constant 0 : index
    %4 = vector.load %arg3[%c0_2, %c0_3] : memref<16x128xf32, #tpu.memory_space<vmem>>, vector<16x128xf32>
    %5 = arith.subf %4, %3 : vector<16x128xf32>
    %cst = arith.constant 9.99999996E-13 : f32
    %6 = vector.broadcast %cst : f32 to vector<16x128xf32>
    %7 = arith.addf %5, %6 : vector<16x128xf32>
    %8 = math.absf %7 : vector<16x128xf32>
    %cst_4 = arith.constant -2.000000e+00 : f32
    %9 = vector.broadcast %cst_4 : f32 to vector<16x128xf32>
    %10 = arith.mulf %9, %8 : vector<16x128xf32>
    %11 = math.exp %10 : vector<16x128xf32>
    %cst_5 = arith.constant 1.000000e+00 : f32
    %12 = vector.broadcast %cst_5 : f32 to vector<16x128xf32>
    %13 = arith.addf %12, %11 : vector<16x128xf32>
    %14 = math.log %13 : vector<16x128xf32>
    %15 = arith.addf %8, %14 : vector<16x128xf32>
    %cst_6 = arith.constant 0.693147182 : f32
    %16 = vector.broadcast %cst_6 : f32 to vector<16x128xf32>
    %17 = arith.subf %15, %16 : vector<16x128xf32>
    %18 = arith.subf %3, %4 : vector<16x128xf32>
    %19 = math.absf %18 : vector<16x128xf32>
    %cst_7 = arith.constant 1.000000e-01 : f32
    %20 = vector.broadcast %cst_7 : f32 to vector<16x128xf32>
    %21 = arith.cmpf olt, %19, %20 : vector<16x128xf32>
    %22 = arith.mulf %19, %19 : vector<16x128xf32>
    %cst_8 = arith.constant 5.000000e+00 : f32
    %23 = vector.broadcast %cst_8 : f32 to vector<16x128xf32>
    %24 = arith.mulf %22, %23 : vector<16x128xf32>
    %cst_9 = arith.constant 5.000000e-02 : f32
    %25 = vector.broadcast %cst_9 : f32 to vector<16x128xf32>
    %26 = arith.subf %19, %25 : vector<16x128xf32>
    %27 = arith.select %21, %24, %26 : vector<16x128xi1>, vector<16x128xf32>
    %28 = arith.addf %17, %27 : vector<16x128xf32>
    %c1_i32 = arith.constant 1 : i32
    %29 = arith.muli %arg0, %c1_i32 : i32
    %30 = arith.addi %29, %arg1 : i32
    %c2048_i32 = arith.constant 2048 : i32
    %31 = arith.muli %30, %c2048_i32 : i32
    %c2048_i32_10 = arith.constant 2048 : i32
    %32 = arith.addi %31, %c2048_i32_10 : i32
    %c2048_i32_11 = arith.constant 2048 : i32
    %33 = arith.cmpi sgt, %32, %c2048_i32_11 : i32
    %true = arith.constant true
    %34 = arith.xori %33, %true : i1
    %35 = arith.extui %34 : i1 to i32
    %c0_i32_12 = arith.constant 0 : i32
    %36 = arith.cmpi ne, %35, %c0_i32_12 : i32
    scf.if %36 {
      %c0_14 = arith.constant 0 : index
      %c0_15 = arith.constant 0 : index
      %39 = vector.load %arg4[%c0_14, %c0_15] : memref<8x128xf32, #tpu.memory_space<vmem>>, vector<8x128xf32>
      %40 = vector.shape_cast %28 : vector<16x128xf32> to vector<2x8x128xf32>
      %cst_16 = arith.constant dense<0.000000e+00> : vector<8x128xf32>
      %41 = vector.multi_reduction <add>, %40, %cst_16 [0] : vector<2x8x128xf32> to vector<8x128xf32>
      %42 = arith.addf %39, %41 : vector<8x128xf32>
      %c0_17 = arith.constant 0 : index
      %c0_18 = arith.constant 0 : index
      %43 = vector.load %arg4[%c0_17, %c0_18] : memref<8x128xf32, #tpu.memory_space<vmem>>, vector<8x128xf32>
      tpu.vector_store %arg4[%c0_17, %c0_18], %42 {strides = array<i32>} : memref<8x128xf32, #tpu.memory_space<vmem>>, vector<8x128xf32>,
    } else {
    }
    %37 = arith.extui %33 : i1 to i32
    %c0_i32_13 = arith.constant 0 : i32
    %38 = arith.cmpi ne, %37, %c0_i32_13 : i32
    scf.if %38 {
      %39 = tpu.iota {dimensions = array<i32: 0>} : vector<16x128xi32>
      %40 = tpu.iota {dimensions = array<i32: 1>} : vector<16x128xi32>
      %c128_i32 = arith.constant 128 : i32
      %41 = vector.broadcast %c128_i32 : i32 to vector<16x128xi32>
      %42 = arith.muli %39, %41 : vector<16x128xi32>
      %43 = vector.broadcast %31 : i32 to vector<16x128xi32>
      %44 = arith.addi %43, %42 : vector<16x128xi32>
      %45 = arith.addi %44, %40 : vector<16x128xi32>
      %c2048_i32_14 = arith.constant 2048 : i32
      %46 = vector.broadcast %c2048_i32_14 : i32 to vector<16x128xi32>
      %47 = arith.cmpi slt, %45, %46 : vector<16x128xi32>
      %cst_15 = arith.constant 0.000000e+00 : f32
      %48 = vector.broadcast %cst_15 : f32 to vector<16x128xf32>
      %49 = arith.select %47, %28, %48 : vector<16x128xi1>, vector<16x128xf32>
      %c0_16 = arith.constant 0 : index
      %c0_17 = arith.constant 0 : index
      %50 = vector.load %arg4[%c0_16, %c0_17] : memref<8x128xf32, #tpu.memory_space<vmem>>, vector<8x128xf32>
      %51 = vector.shape_cast %49 : vector<16x128xf32> to vector<2x8x128xf32>
      %cst_18 = arith.constant dense<0.000000e+00> : vector<8x128xf32>
      %52 = vector.multi_reduction <add>, %51, %cst_18 [0] : vector<2x8x128xf32> to vector<8x128xf32>
      %53 = arith.addf %50, %52 : vector<8x128xf32>
      %c0_19 = arith.constant 0 : index
      %c0_20 = arith.constant 0 : index
      %54 = vector.load %arg4[%c0_19, %c0_20] : memref<8x128xf32, #tpu.memory_space<vmem>>, vector<8x128xf32>
      tpu.vector_store %arg4[%c0_19, %c0_20], %53 {strides = array<i32>} : memref<8x128xf32, #tpu.memory_space<vmem>>, vector<8x128xf32>,
    } else {
    }
    return
  }
  func.func @transform_0(%arg0: i32, %arg1: i32) -> (i32, i32) {
    %c1_i32 = arith.constant 1 : i32
    %0 = arith.muli %arg0, %c1_i32 : i32
    %1 = arith.addi %0, %arg1 : i32
    %c0_i32 = arith.constant 0 : i32
    %c0_i32_0 = arith.constant 0 : i32
    return %1, %c0_i32 : i32, i32
  }
  func.func @transform_1(%arg0: i32, %arg1: i32) -> (i32, i32) {
    %c1_i32 = arith.constant 1 : i32
    %0 = arith.muli %arg0, %c1_i32 : i32
    %1 = arith.addi %0, %arg1 : i32
    %c0_i32 = arith.constant 0 : i32
    %c0_i32_0 = arith.constant 0 : i32
    return %1, %c0_i32 : i32, i32
  }
  func.func @transform_2(%arg0: i32, %arg1: i32) -> (i32, i32) {
    %c0_i32 = arith.constant 0 : i32
    %c0_i32_0 = arith.constant 0 : i32
    return %arg0, %c0_i32 : i32, i32
  }
}

</mosaic_0001>

<llo_original>
// kernel: tpu_custom_call.1
$region0: #{tpu_custom_call.1}
  #allocation0 [shape = 'u32[]', space=smem, size = 0x4, offset = 0x4, fixed_abs, tag = 'smem constant byte address 0x4 - core index']
  #allocation1 [shape = 'u32[144,128]{1,0:T(1,128)}', space=vmem, size = 0x12000, scoped, tag = 'internal scratch']
  %s0 = inlined_call_operand.hbm [shape: f32[16,128], index: 0, kind: input, shape index: {}]
  %s1 = inlined_call_operand.hbm [shape: f32[16,128], index: 1, kind: input, shape index: {}]
  %s2 = inlined_call_operand.hbm [shape: f32[8,128], index: 2, kind: output, shape index: {}]
  %s3 = sld [smem:[#allocation0]]
  $region38: #{tpu_custom_call.1} parent=0
    _
  %s5 = ssub.s32 1, %s3
  %s6 = scalar_select 0, %s5, %s3
  $region1: #{tpu_custom_call.1} parent=0
    #allocation2 [shape = 'u8[8192]{0}', space=vmem, size = 0x2000, scoped, tag = 'input window, operand 0, single buffered']
    #allocation3 [shape = 's32[1]{0}', space=sflag, size = 0x4, scoped, tag = 'scoped memory for tpu_custom_call.1']
    #allocation4 [shape = 's32[1]{0}', space=sflag, size = 0x4, scoped, tag = 'scoped memory for tpu_custom_call.1']
    #allocation5 [shape = 'u8[8192]{0}', space=vmem, size = 0x2000, scoped, tag = 'input window, operand 1, single buffered']
    #allocation6 [shape = 's32[1]{0}', space=sflag, size = 0x4, scoped, tag = 'scoped memory for tpu_custom_call.1']
    #allocation7 [shape = 'u8[4096]{0}', space=vmem, size = 0x1000, scoped, tag = 'output window, operand 0, single buffered']
    %7 = vsyncpa [#allocation3], 0
    %8 = vsyncpa [#allocation6], 0
    %9 = vsyncpa [#allocation4], 0
    // Predicated region
    $region2: #{tpu_custom_call.1} parent=1 // pred_check
      _
    $region3: #{tpu_custom_call.1} parent=1 // pred_check_branch
      %11 = sbr.rel (0) target = $region5
    $region4: #{tpu_custom_call.1} parent=1 // pred_region
      %s12 = sadd.s32 0, 0
      %s13 = smul.u32 2, %s12
      %s15 = ssub.s32 256, 256
      %16 = vsyncadd [#allocation3], %s15
      %s17 = smul.addr %s13, 128
      %s18 = scalar_lea.hbm %s0, %s17
      %s19 = sshll.u32 [#allocation2], 4
      %s20 = int_to_ptr.vmem [resolvable:$true] %s19
      %25 = dma.hbm_to_vmem [thread:$0]  %s18, 256, %s20, [#allocation3], 128, 128, 8
    $region5: #{tpu_custom_call.1} parent=1 // pred_fallthru
      _
    // Predicated region
    $region6: #{tpu_custom_call.1} parent=1 // pred_check
      _
    $region7: #{tpu_custom_call.1} parent=1 // pred_check_branch
      %27 = sbr.rel (0) target = $region9
    $region8: #{tpu_custom_call.1} parent=1 // pred_region
      %s28 = sadd.s32 0, 0
      %s29 = smul.u32 2, %s28
      %s31 = ssub.s32 256, 256
      %32 = vsyncadd [#allocation6], %s31
      %s33 = smul.addr %s29, 128
      %s34 = scalar_lea.hbm %s1, %s33
      %s35 = sshll.u32 [#allocation5], 4
      %s36 = int_to_ptr.vmem [resolvable:$true] %s35
      %41 = dma.hbm_to_vmem [thread:$0]  %s34, 256, %s36, [#allocation6], 128, 128, 8
    $region9: #{tpu_custom_call.1} parent=1 // pred_fallthru
      _
    // Predicated region
    $region10: #{tpu_custom_call.1} parent=1 // pred_check
      _
    $region11: #{tpu_custom_call.1} parent=1 // pred_check_branch
      %43 = sbr.rel (0) target = $region13
    $region12: #{tpu_custom_call.1} parent=1 // pred_region
      %44 = dma.done [#allocation3], 256
    $region13: #{tpu_custom_call.1} parent=1 // pred_fallthru
      _
    // Predicated region
    $region14: #{tpu_custom_call.1} parent=1 // pred_check
      _
    $region15: #{tpu_custom_call.1} parent=1 // pred_check_branch
      %46 = sbr.rel (0) target = $region17
    $region16: #{tpu_custom_call.1} parent=1 // pred_region
      %47 = dma.done [#allocation6], 256
    $region17: #{tpu_custom_call.1} parent=1 // pred_fallthru
      _
    %s48 = sadd.s32 0, 0
    %s49 = smul.u32 2, %s48
    %s50 = sadd.s32 0, 0
    %s51 = smul.u32 2, %s50
    %p52 = scmp.eq.s32.totalorder 0, 0
    // Predicated region
    $region18: #{tpu_custom_call.1} parent=1 // pred_check
      %p53 = pneg %p52
    $region19: #{tpu_custom_call.1} parent=1 // pred_check_branch
      %55 = sbr.rel (%p53) target = $region21
    $region20: #{tpu_custom_call.1} parent=1 // pred_region
      %56 = vst [vmem:[#allocation7] sm:$0xff] 0.0
    $region21: #{tpu_custom_call.1} parent=1 // pred_fallthru
      _
    %v57 = vld [vmem:[#allocation2] sm:$0xff]
    %v58 = vld [vmem:[#allocation2 + $0x8] sm:$0xff]
    %v59 = vld [vmem:[#allocation5] sm:$0xff]
    %v60 = vld [vmem:[#allocation5 + $0x8] sm:$0xff]
    %v61 = vsub.f32 %v59, %v57
    %v62 = vsub.f32 %v60, %v58
    %v63 = vadd.f32 %v61, 1e-12
    %v64 = vadd.f32 %v62, 1e-12
    %v65 = vand.u32 2147483647, %v63
    %v66 = vand.u32 2147483647, %v64
    %v67 = vmul.f32 %v65, -2.0
    %v68 = vmul.f32 %v66, -2.0
    %v69 = vmul.f32 %v67, 1.442695
    %v70 = vpow.pop %v69
    %v71 = vmul.f32 %v68, 1.442695
    %v72 = vpow.pop %v71
    %v73 = vadd.f32 %v70, 1.0
    %v74 = vadd.f32 %v72, 1.0
    %v75 = vlog2.pop %v73
    %v76 = vmul.f32 %v75, 0.6931472
    %v77 = vlog2.pop %v74
    %v78 = vmul.f32 %v77, 0.6931472
    %v79 = vadd.f32 %v65, %v76
    %v80 = vadd.f32 %v66, %v78
    %v81 = vsub.f32 %v79, 0.6931472
    %v82 = vsub.f32 %v80, 0.6931472
    %v83 = vsub.f32 %v57, %v59
    %v84 = vsub.f32 %v58, %v60
    %v85 = vand.u32 2147483647, %v83
    %v86 = vand.u32 2147483647, %v84
    %vm87 = vcmp.lt.f32.partialorder %v85, 0.1
    %vm88 = vcmp.lt.f32.partialorder %v86, 0.1
    %v89 = vmul.f32 %v85, %v85
    %v90 = vmul.f32 %v86, %v86
    %v91 = vmul.f32 %v89, 5.0
    %v92 = vmul.f32 %v90, 5.0
    %v93 = vsub.f32 %v85, 0.05
    %v94 = vsub.f32 %v86, 0.05
    %v95 = vsel %vm87, %v91, %v93
    %v96 = vsel %vm88, %v92, %v94
    %v97 = vadd.f32 %v81, %v95
    %v98 = vadd.f32 %v82, %v96
    %s99 = sadd.s32 0, 0
    %s100 = smul.u32 %s99, 2048
    %s101 = sadd.s32 %s100, 2048
    %p102 = scmp.gt.s32.totalorder %s101, 2048
    %p103 = scmp.le.s32.totalorder %s101, 2048
    // Predicated region
    $region22: #{tpu_custom_call.1} parent=1 // pred_check
      %p104 = pneg %p103
    $region23: #{tpu_custom_call.1} parent=1 // pred_check_branch
      %106 = sbr.rel (%p104) target = $region25
    $region24: #{tpu_custom_call.1} parent=1 // pred_region
      %v107 = vld [vmem:[#allocation7] sm:$0xff]
      %v108 = vadd.f32 %v97, %v98
      %v109 = vadd.f32 %v107, %v108
      %110 = vst [vmem:[#allocation7] sm:$0xff] %v109
    $region25: #{tpu_custom_call.1} parent=1 // pred_fallthru
      _
    // Predicated region
    $region26: #{tpu_custom_call.1} parent=1 // pred_check
      %p111 = pneg %p102
    $region27: #{tpu_custom_call.1} parent=1 // pred_check_branch
      %113 = sbr.rel (%p111) target = $region29
    $region28: #{tpu_custom_call.1} parent=1 // pred_region
      %v114 = vlaneseq
      %v115 = vshrl.u32 %v114, 7
      %v116 = vadd.s32 %v115, 8
      %v117 = vlaneseq
      %v118 = vand.u32 %v117, 127
      %v119 = vmul.u32 %v115, 128
      %v120 = vmul.u32 %v116, 128
      %v121 = vstv %s100
      %v122 = vadd.s32 %v121, %v119
      %v123 = vadd.s32 %v121, %v120
      %v124 = vadd.s32 %v122, %v118
      %v125 = vadd.s32 %v123, %v118
      %vm126 = vcmp.lt.s32.totalorder %v124, 2048
      %vm127 = vcmp.lt.s32.totalorder %v125, 2048
      %v128 = vsel %vm126, %v97, 0.0
      %v129 = vsel %vm127, %v98, 0.0
      %v130 = vld [vmem:[#allocation7] sm:$0xff]
      %v131 = vadd.f32 %v128, %v129
      %v132 = vadd.f32 %v130, %v131
      %133 = vst [vmem:[#allocation7] sm:$0xff] %v132
    $region29: #{tpu_custom_call.1} parent=1 // pred_fallthru
      _
    // Predicated region
    $region30: #{tpu_custom_call.1} parent=1 // pred_check
      _
    $region31: #{tpu_custom_call.1} parent=1 // pred_check_branch
      %135 = sbr.rel (0) target = $region33
    $region32: #{tpu_custom_call.1} parent=1 // pred_region
      %s137 = ssub.s32 128, 128
      %138 = vsyncadd [#allocation4], %s137
      %s140 = sshll.u32 [#allocation7], 4
      %s141 = int_to_ptr.vmem [resolvable:$true] %s140
      %143 = dma.vmem_to_hbm [thread:$0]  %s141, 128, %s2, [#allocation4]
    $region33: #{tpu_custom_call.1} parent=1 // pred_fallthru
      _
    // Predicated region
    $region34: #{tpu_custom_call.1} parent=1 // pred_check
      _
    $region35: #{tpu_custom_call.1} parent=1 // pred_check_branch
      %145 = sbr.rel (0) target = $region37
    $region36: #{tpu_custom_call.1} parent=1 // pred_region
      %146 = dma.done [#allocation4], 128
    $region37: #{tpu_custom_call.1} parent=1 // pred_fallthru
      _
    %147 = vsyncpa [#allocation3], 1
    %148 = vsyncpa [#allocation6], 1
    %149 = vsyncpa [#allocation4], 1

</llo_original>
